<compile_context>
chip_gen: v5e
topology: v5e:2x2
jax: 0.10.0
libtpu: 0.0.40
codegen_flags: <defaults>
</compile_context>

<pallas_src>
import functools

import numpy as np
import jax
import jax.numpy as jnp
from jax.experimental import pallas as pl
from jax.experimental.pallas import tpu as pltpu


# ------------------------------- Pallas kernel ------------------------------

def _simple_block_kernel(x_ref, w1_ref, b1_ref, w2_ref, b2_ref, o_ref,
                         xp1_ref, mid_ref, *,
                         H, W, Cin, Cmid, Cout, K, pad, stride,
                         Ho1, Wo1, Ho2, Wo2, Hs1, Hs2):
    """One batch element per grid step.

    x_ref:   (1, H, W*Cin)            unpadded input, channels-last flattened
    w1_ref:  (K, Wp1*Cin,  Wo1*Cmid)  banded conv1 weights (BN1 scale folded)
    b1_ref:  (1, Wo1*Cmid)            BN1 bias, tiled to lane layout
    w2_ref:  (K, Wp2*Cmid, Wo2*Cout)  banded conv2 weights (BN2 scale folded)
    b2_ref:  (1, Wo2*Cout)            BN2 bias, tiled to lane layout
    o_ref:   (1, Ho2, Wo2*Cout)       lane-dense output slab
    xp1_ref: VMEM (Hp1a, Wp1*Cin)     zero-padded conv1 input scratch
    mid_ref: VMEM (Hp2,  Wp2*Cmid)    zero-padded intermediate scratch
    """
    f32 = jnp.float32

    def band_conv(src_ref, w_ref, b_ref, n_rows):
        # K wide matmuls; kw/ci taps (and column stride) live in the banded
        # weights, so contraction depth is Wp*Cin per tap-row instead of Cin.
        acc = jnp.dot(src_ref[pl.ds(0, n_rows), :], w_ref[0],
                      preferred_element_type=f32)
        for kh in range(1, K):
            acc = acc + jnp.dot(src_ref[pl.ds(kh, n_rows), :], w_ref[kh],
                                preferred_element_type=f32)
        # Fused BN(eval) bias + ReLU (scale already folded into the weights).
        return jnp.maximum(acc + b_ref[...], 0.0)

    # ---------------- conv1: in-kernel zero padding + banded matmuls --------
    xp1_ref[...] = jnp.zeros_like(xp1_ref)
    xp1_ref[pl.ds(pad, H), pl.ds(pad * Cin, W * Cin)] = x_ref[0].astype(f32)

    y1 = band_conv(xp1_ref, w1_ref, b1_ref, Hs1)          # (Hs1, Wo1*Cmid)
    if stride == 1:
        y1 = y1[:Ho1, :]
    else:
        # Row decimation via a pure reshape + contiguous column slice
        # (no strided sublane loads).
        y1 = y1[:stride * Ho1, :].reshape(Ho1, stride * Wo1 * Cmid)
        y1 = y1[:, :Wo1 * Cmid]

    # ---------------- conv2: intermediate stays in VMEM ---------------------
    mid_ref[...] = jnp.zeros_like(mid_ref)
    mid_ref[pl.ds(pad, Ho1), pl.ds(pad * Cmid, Wo1 * Cmid)] = y1

    y2 = band_conv(mid_ref, w2_ref, b2_ref, Hs2)           # (Ho2, Wo2*Cout)

    # Lane-dense store: last dim is Wo2*Cout (128 for the default test shape).
    o_ref[0] = y2.astype(o_ref.dtype)


# ------------------------------- wrapper -------------------------------------

def _fold_bn(p, eps=1e-5):
    """Fold eval-mode BatchNorm into the conv weights + a per-channel bias."""
    scale = p["gamma"] / jnp.sqrt(p["rvar"] + eps)
    w = p["w"].astype(jnp.float32) * scale                 # (K,K,Ci,Co)
    b = p["beta"] - p["rmean"] * scale                     # (Co,)
    return w, b.astype(jnp.float32)


def _banded_weight(wf, wp_in, wo, stride):
    """Build the banded (Toeplitz) weight: (K, Wp_in*Ci, Wo*Co).

    Wb[kh, (wo*stride+kw)*Ci + ci, wo*Co + co] = wf[kh, kw, ci, co]
    One-time host-side weight prep (like the BN fold)."""
    wf = np.asarray(wf, dtype=np.float32)
    K, _, Ci, Co = wf.shape
    Wb = np.zeros((K, wp_in * Ci, wo * Co), np.float32)
    for w in range(wo):
        for kw in range(K):
            c0 = (w * stride + kw) * Ci
            Wb[:, c0:c0 + Ci, w * Co:(w + 1) * Co] = wf[:, kw]
    return jnp.asarray(Wb)


def simple_block(x_nchw, params, *, stride=1, eps=1e-5):
    """SimpleBlock forward: ConvBNReLU(stride) -> ConvBNReLU(1). NCHW in/out."""
    N, Cin, H, W = x_nchw.shape
    p1, p2 = params["conv1"], params["conv2"]
    K = p1["w"].shape[0]
    Cmid = p1["w"].shape[-1]
    Cout = p2["w"].shape[-1]
    pad = 1

    Ho1 = (H + 2 * pad - K) // stride + 1
    Wo1 = (W + 2 * pad - K) // stride + 1
    Ho2 = (Ho1 + 2 * pad - K) + 1
    Wo2 = (Wo1 + 2 * pad - K) + 1

    Hp1, Wp1 = H + 2 * pad, W + 2 * pad
    Hp2, Wp2 = Ho1 + 2 * pad, Wo1 + 2 * pad
    # Extra zero rows (if needed) so the stride-1 row sweep covers stride*Ho1.
    Hp1_alloc = max(Hp1, stride * Ho1 + K - 1)
    Hs1 = Hp1_alloc - K + 1          # stride-1 output rows computed for conv1
    Hs2 = Hp2 - K + 1                # == Ho2 (conv2 is stride 1)

    # Fold BN into weights/bias; build banded weights and lane-tiled biases.
    w1f, b1 = _fold_bn(p1, eps)
    w2f, b2 = _fold_bn(p2, eps)
    w1b = _banded_weight(w1f, Wp1, Wo1, stride)            # (K, Wp1*Cin, Wo1*Cmid)
    w2b = _banded_weight(w2f, Wp2, Wo2, 1)                 # (K, Wp2*Cmid, Wo2*Cout)
    b1t = jnp.tile(b1, Wo1).reshape(1, Wo1 * Cmid)
    b2t = jnp.tile(b2, Wo2).reshape(1, Wo2 * Cout)

    # NCHW -> NHWC -> (N, H, W*Cin): rows on sublanes, W*C on lanes.
    x2d = jnp.transpose(x_nchw, (0, 2, 3, 1)).reshape(N, H, W * Cin)

    kernel = functools.partial(
        _simple_block_kernel,
        H=H, W=W, Cin=Cin, Cmid=Cmid, Cout=Cout, K=K, pad=pad, stride=stride,
        Ho1=Ho1, Wo1=Wo1, Ho2=Ho2, Wo2=Wo2, Hs1=Hs1, Hs2=Hs2)

    out2d = pl.pallas_call(
        kernel,
        out_shape=jax.ShapeDtypeStruct((N, Ho2, Wo2 * Cout), x_nchw.dtype),
        grid=(N,),
        in_specs=[
            pl.BlockSpec((1, H, W * Cin), lambda n: (n, 0, 0)),
            pl.BlockSpec(w1b.shape, lambda n: (0, 0, 0)),
            pl.BlockSpec((1, Wo1 * Cmid), lambda n: (0, 0)),
            pl.BlockSpec(w2b.shape, lambda n: (0, 0, 0)),
            pl.BlockSpec((1, Wo2 * Cout), lambda n: (0, 0)),
        ],
        out_specs=pl.BlockSpec((1, Ho2, Wo2 * Cout), lambda n: (n, 0, 0)),
        scratch_shapes=[
            pltpu.VMEM((Hp1_alloc, Wp1 * Cin), jnp.float32),
            pltpu.VMEM((Hp2, Wp2 * Cmid), jnp.float32),
        ],
        compiler_params=pltpu.CompilerParams(dimension_semantics=("parallel",)),
    )(x2d, w1b, b1t, w2b, b2t)

    out = out2d.reshape(N, Ho2, Wo2, Cout)                 # lane-dense -> NHWC
    return jnp.transpose(out, (0, 3, 1, 2))                # NHWC -> NCHW


# ----------------------------- pure-JAX reference ----------------------------

def _ref_conv_bn_relu(x_nhwc, w_hwio, gamma, beta, rmean, rvar,
                      *, stride=1, padding=1, eps=1e-5):
    y = jax.lax.conv_general_dilated(
        x_nhwc, w_hwio, window_strides=(stride, stride),
        padding=[(padding, padding), (padding, padding)],
        dimension_numbers=("NHWC", "HWIO", "NHWC"))
    y = (y - rmean) / jnp.sqrt(rvar + eps) * gamma + beta
    return jnp.maximum(y, 0.0)


def _ref_simple_block(x_nchw, params, *, stride=1):
    x = jnp.transpose(x_nchw, (0, 2, 3, 1))
    p1, p2 = params["conv1"], params["conv2"]
    x = _ref_conv_bn_relu(x, p1["w"], p1["gamma"], p1["beta"],
                          p1["rmean"], p1["rvar"], stride=stride)
    x = _ref_conv_bn_relu(x, p2["w"], p2["gamma"], p2["beta"],
                          p2["rmean"], p2["rvar"], stride=1)
    return jnp.transpose(x, (0, 3, 1, 2))


# ----------------------------- param init ------------------------------------

def init_conv_bn(key, cin, cout, k=3):
    kw, kg, kb, km, kv = jax.random.split(key, 5)
    # PyTorch conv weight is (Cout, Cin, K, K); convert to HWIO for NHWC conv.
    w_oihw = jax.random.normal(kw, (cout, cin, k, k), jnp.float32) * 0.1
    w_hwio = jnp.transpose(w_oihw, (2, 3, 1, 0))
    return dict(
        w=w_hwio,
        gamma=1.0 + 0.1 * jax.random.normal(kg, (cout,), jnp.float32),
        beta=0.1 * jax.random.normal(kb, (cout,), jnp.float32),
        rmean=0.05 * jax.random.normal(km, (cout,), jnp.float32),
        rvar=jnp.abs(jax.random.normal(kv, (cout,), jnp.float32)) * 0.1 + 1.0,
    )


if __name__ == "__main__":
    key = jax.random.PRNGKey(0)
    kx, k1, k2 = jax.random.split(key, 3)

    N, Cin, Cout, H, W = 2, 4, 8, 16, 16
    x = jax.random.normal(kx, (N, Cin, H, W), jnp.float32)  # NCHW, like PyTorch
    params = {
        "conv1": init_conv_bn(k1, Cin, Cout),
        "conv2": init_conv_bn(k2, Cout, Cout),
    }

    # Validate both stride=1 and the stride=2 path against the lax.conv ref.
    for stride in (1, 2):
        out = jax.block_until_ready(simple_block(x, params, stride=stride))
        ref = _ref_simple_block(x, params, stride=stride)
        assert out.shape == (N, Cout, H // stride, W // stride), out.shape
        err = float(jnp.max(jnp.abs(out - ref)))
        assert jnp.allclose(out, ref, atol=1e-4, rtol=1e-4), err

    print("KERNEL_OK")
</pallas_src>

<mosaic_0001>
module attributes {stable_mosaic.version = 11 : i64} {
  func.func @_simple_block_kernel(%arg0: i32, %arg1: memref<1x16x64xf32, #tpu.memory_space<vmem>>, %arg2: memref<3x72x128xf32, #tpu.memory_space<vmem>>, %arg3: memref<1x128xf32, #tpu.memory_space<vmem>>, %arg4: memref<3x144x128xf32, #tpu.memory_space<vmem>>, %arg5: memref<1x128xf32, #tpu.memory_space<vmem>>, %arg6: memref<1x16x128xf32, #tpu.memory_space<vmem>>, %arg7: memref<18x72xf32, #tpu.memory_space<vmem>>, %arg8: memref<18x144xf32, #tpu.memory_space<vmem>>) attributes {dimension_semantics = [#tpu.dimension_semantics<parallel>], iteration_bounds = array<i64: 2>, scalar_prefetch = 0 : i64, scratch_operands = 2 : i64, tpu.core_type = #tpu.core_type<tc>, window_params = [{transform_indices = @transform_0, window_bounds = array<i64: 1, 16, 64>}, {pipeline_mode = #tpu.pipeline_mode<synchronous>, transform_indices = @transform_1, window_bounds = array<i64: 3, 72, 128>}, {pipeline_mode = #tpu.pipeline_mode<synchronous>, transform_indices = @transform_2, window_bounds = array<i64: 1, 128>}, {pipeline_mode = #tpu.pipeline_mode<synchronous>, transform_indices = @transform_3, window_bounds = array<i64: 3, 144, 128>}, {pipeline_mode = #tpu.pipeline_mode<synchronous>, transform_indices = @transform_4, window_bounds = array<i64: 1, 128>}, {transform_indices = @transform_5, window_bounds = array<i64: 1, 16, 128>}]} {
    %cst = arith.constant 0.000000e+00 : f32
    %0 = vector.broadcast %cst : f32 to vector<18x72xf32>
    %c0 = arith.constant 0 : index
    %c0_0 = arith.constant 0 : index
    %1 = vector.load %arg7[%c0, %c0_0] : memref<18x72xf32, #tpu.memory_space<vmem>>, vector<18x72xf32>
    tpu.vector_store %arg7[%c0, %c0_0], %0 {strides = array<i32>} : memref<18x72xf32, #tpu.memory_space<vmem>>, vector<18x72xf32>,
    %c0_1 = arith.constant 0 : index
    %c0_2 = arith.constant 0 : index
    %c0_3 = arith.constant 0 : index
    %2 = vector.load %arg1[%c0_1, %c0_2, %c0_3] : memref<1x16x64xf32, #tpu.memory_space<vmem>>, vector<1x16x64xf32>
    %3 = vector.shape_cast %2 : vector<1x16x64xf32> to vector<16x64xf32>
    %c1 = arith.constant 1 : index
    %c4 = arith.constant 4 : index
    %4 = vector.load %arg7[%c1, %c4] : memref<18x72xf32, #tpu.memory_space<vmem>>, vector<16x64xf32>
    tpu.vector_store %arg7[%c1, %c4], %3 {strides = array<i32>} : memref<18x72xf32, #tpu.memory_space<vmem>>, vector<16x64xf32>,
    %c0_4 = arith.constant 0 : index
    %c0_5 = arith.constant 0 : index
    %5 = vector.load %arg7[%c0_4, %c0_5] : memref<18x72xf32, #tpu.memory_space<vmem>>, vector<16x72xf32>
    %c0_6 = arith.constant 0 : index
    %c0_7 = arith.constant 0 : index
    %c0_8 = arith.constant 0 : index
    %6 = vector.load %arg2[%c0_6, %c0_7, %c0_8] : memref<3x72x128xf32, #tpu.memory_space<vmem>>, vector<1x72x128xf32>
    %7 = vector.shape_cast %6 : vector<1x72x128xf32> to vector<72x128xf32>
    %cst_9 = arith.constant dense<0.000000e+00> : vector<16x128xf32>
    %8 = tpu.matmul %5, %7, %cst_9 {dimension_numbers = #tpu.dot_dimension_numbers<[1], [0], [0], [1], [0, 0, 1, 1], [], []>} : vector<16x72xf32>, vector<72x128xf32>, vector<16x128xf32> -> vector<16x128xf32>
    %c1_10 = arith.constant 1 : index
    %c0_11 = arith.constant 0 : index
    %9 = vector.load %arg7[%c1_10, %c0_11] : memref<18x72xf32, #tpu.memory_space<vmem>>, vector<16x72xf32>
    %c1_12 = arith.constant 1 : index
    %c0_13 = arith.constant 0 : index
    %c0_14 = arith.constant 0 : index
    %10 = vector.load %arg2[%c1_12, %c0_13, %c0_14] : memref<3x72x128xf32, #tpu.memory_space<vmem>>, vector<1x72x128xf32>
    %11 = vector.shape_cast %10 : vector<1x72x128xf32> to vector<72x128xf32>
    %cst_15 = arith.constant dense<0.000000e+00> : vector<16x128xf32>
    %12 = tpu.matmul %9, %11, %cst_15 {dimension_numbers = #tpu.dot_dimension_numbers<[1], [0], [0], [1], [0, 0, 1, 1], [], []>} : vector<16x72xf32>, vector<72x128xf32>, vector<16x128xf32> -> vector<16x128xf32>
    %13 = arith.addf %8, %12 : vector<16x128xf32>
    %c2 = arith.constant 2 : index
    %c0_16 = arith.constant 0 : index
    %14 = vector.load %arg7[%c2, %c0_16] : memref<18x72xf32, #tpu.memory_space<vmem>>, vector<16x72xf32>
    %c2_17 = arith.constant 2 : index
    %c0_18 = arith.constant 0 : index
    %c0_19 = arith.constant 0 : index
    %15 = vector.load %arg2[%c2_17, %c0_18, %c0_19] : memref<3x72x128xf32, #tpu.memory_space<vmem>>, vector<1x72x128xf32>
    %16 = vector.shape_cast %15 : vector<1x72x128xf32> to vector<72x128xf32>
    %cst_20 = arith.constant dense<0.000000e+00> : vector<16x128xf32>
    %17 = tpu.matmul %14, %16, %cst_20 {dimension_numbers = #tpu.dot_dimension_numbers<[1], [0], [0], [1], [0, 0, 1, 1], [], []>} : vector<16x72xf32>, vector<72x128xf32>, vector<16x128xf32> -> vector<16x128xf32>
    %18 = arith.addf %13, %17 : vector<16x128xf32>
    %c0_21 = arith.constant 0 : index
    %c0_22 = arith.constant 0 : index
    %19 = vector.load %arg3[%c0_21, %c0_22] : memref<1x128xf32, #tpu.memory_space<vmem>>, vector<1x128xf32>
    %20 = vector.broadcast %19 : vector<1x128xf32> to vector<16x128xf32>
    %21 = arith.addf %18, %20 : vector<16x128xf32>
    %cst_23 = arith.constant 0.000000e+00 : f32
    %22 = vector.broadcast %cst_23 : f32 to vector<16x128xf32>
    %23 = arith.maximumf %21, %22 : vector<16x128xf32>
    %cst_24 = arith.constant 0.000000e+00 : f32
    %24 = vector.broadcast %cst_24 : f32 to vector<18x144xf32>
    %c0_25 = arith.constant 0 : index
    %c0_26 = arith.constant 0 : index
    %25 = vector.load %arg8[%c0_25, %c0_26] : memref<18x144xf32, #tpu.memory_space<vmem>>, vector<18x144xf32>
    tpu.vector_store %arg8[%c0_25, %c0_26], %24 {strides = array<i32>} : memref<18x144xf32, #tpu.memory_space<vmem>>, vector<18x144xf32>,
    %c1_27 = arith.constant 1 : index
    %c8 = arith.constant 8 : index
    %26 = vector.load %arg8[%c1_27, %c8] : memref<18x144xf32, #tpu.memory_space<vmem>>, vector<16x128xf32>
    tpu.vector_store %arg8[%c1_27, %c8], %23 {strides = array<i32>} : memref<18x144xf32, #tpu.memory_space<vmem>>, vector<16x128xf32>,
    %c0_28 = arith.constant 0 : index
    %c0_29 = arith.constant 0 : index
    %27 = vector.load %arg8[%c0_28, %c0_29] : memref<18x144xf32, #tpu.memory_space<vmem>>, vector<16x144xf32>
    %c0_30 = arith.constant 0 : index
    %c0_31 = arith.constant 0 : index
    %c0_32 = arith.constant 0 : index
    %28 = vector.load %arg4[%c0_30, %c0_31, %c0_32] : memref<3x144x128xf32, #tpu.memory_space<vmem>>, vector<1x144x128xf32>
    %29 = vector.shape_cast %28 : vector<1x144x128xf32> to vector<144x128xf32>
    %cst_33 = arith.constant dense<0.000000e+00> : vector<16x128xf32>
    %30 = tpu.matmul %27, %29, %cst_33 {dimension_numbers = #tpu.dot_dimension_numbers<[1], [0], [0], [1], [0, 0, 1, 1], [], []>} : vector<16x144xf32>, vector<144x128xf32>, vector<16x128xf32> -> vector<16x128xf32>
    %c1_34 = arith.constant 1 : index
    %c0_35 = arith.constant 0 : index
    %31 = vector.load %arg8[%c1_34, %c0_35] : memref<18x144xf32, #tpu.memory_space<vmem>>, vector<16x144xf32>
    %c1_36 = arith.constant 1 : index
    %c0_37 = arith.constant 0 : index
    %c0_38 = arith.constant 0 : index
    %32 = vector.load %arg4[%c1_36, %c0_37, %c0_38] : memref<3x144x128xf32, #tpu.memory_space<vmem>>, vector<1x144x128xf32>
    %33 = vector.shape_cast %32 : vector<1x144x128xf32> to vector<144x128xf32>
    %cst_39 = arith.constant dense<0.000000e+00> : vector<16x128xf32>
    %34 = tpu.matmul %31, %33, %cst_39 {dimension_numbers = #tpu.dot_dimension_numbers<[1], [0], [0], [1], [0, 0, 1, 1], [], []>} : vector<16x144xf32>, vector<144x128xf32>, vector<16x128xf32> -> vector<16x128xf32>
    %35 = arith.addf %30, %34 : vector<16x128xf32>
    %c2_40 = arith.constant 2 : index
    %c0_41 = arith.constant 0 : index
    %36 = vector.load %arg8[%c2_40, %c0_41] : memref<18x144xf32, #tpu.memory_space<vmem>>, vector<16x144xf32>
    %c2_42 = arith.constant 2 : index
    %c0_43 = arith.constant 0 : index
    %c0_44 = arith.constant 0 : index
    %37 = vector.load %arg4[%c2_42, %c0_43, %c0_44] : memref<3x144x128xf32, #tpu.memory_space<vmem>>, vector<1x144x128xf32>
    %38 = vector.shape_cast %37 : vector<1x144x128xf32> to vector<144x128xf32>
    %cst_45 = arith.constant dense<0.000000e+00> : vector<16x128xf32>
    %39 = tpu.matmul %36, %38, %cst_45 {dimension_numbers = #tpu.dot_dimension_numbers<[1], [0], [0], [1], [0, 0, 1, 1], [], []>} : vector<16x144xf32>, vector<144x128xf32>, vector<16x128xf32> -> vector<16x128xf32>
    %40 = arith.addf %35, %39 : vector<16x128xf32>
    %c0_46 = arith.constant 0 : index
    %c0_47 = arith.constant 0 : index
    %41 = vector.load %arg5[%c0_46, %c0_47] : memref<1x128xf32, #tpu.memory_space<vmem>>, vector<1x128xf32>
    %42 = vector.broadcast %41 : vector<1x128xf32> to vector<16x128xf32>
    %43 = arith.addf %40, %42 : vector<16x128xf32>
    %cst_48 = arith.constant 0.000000e+00 : f32
    %44 = vector.broadcast %cst_48 : f32 to vector<16x128xf32>
    %45 = arith.maximumf %43, %44 : vector<16x128xf32>
    %c0_49 = arith.constant 0 : index
    %c0_50 = arith.constant 0 : index
    %c0_51 = arith.constant 0 : index
    %46 = vector.load %arg6[%c0_49, %c0_50, %c0_51] : memref<1x16x128xf32, #tpu.memory_space<vmem>>, vector<1x16x128xf32>
    %47 = vector.shape_cast %46 : vector<1x16x128xf32> to vector<16x128xf32>
    %48 = vector.shape_cast %45 : vector<16x128xf32> to vector<1x16x128xf32>
    tpu.vector_store %arg6[%c0_49, %c0_50, %c0_51], %48 {strides = array<i32>} : memref<1x16x128xf32, #tpu.memory_space<vmem>>, vector<1x16x128xf32>,
    return
  }
  func.func @transform_0(%arg0: i32) -> (i32, i32, i32) {
    %c0_i32 = arith.constant 0 : i32
    %c0_i32_0 = arith.constant 0 : i32
    %c0_i32_1 = arith.constant 0 : i32
    return %arg0, %c0_i32, %c0_i32_0 : i32, i32, i32
  }
  func.func @transform_1(%arg0: i32) -> (i32, i32, i32) {
    %c0_i32 = arith.constant 0 : i32
    %c0_i32_0 = arith.constant 0 : i32
    %c0_i32_1 = arith.constant 0 : i32
    %c0_i32_2 = arith.constant 0 : i32
    return %c0_i32, %c0_i32_0, %c0_i32_1 : i32, i32, i32
  }
  func.func @transform_2(%arg0: i32) -> (i32, i32) {
    %c0_i32 = arith.constant 0 : i32
    %c0_i32_0 = arith.constant 0 : i32
    %c0_i32_1 = arith.constant 0 : i32
    return %c0_i32, %c0_i32_0 : i32, i32
  }
  func.func @transform_3(%arg0: i32) -> (i32, i32, i32) {
    %c0_i32 = arith.constant 0 : i32
    %c0_i32_0 = arith.constant 0 : i32
    %c0_i32_1 = arith.constant 0 : i32
    %c0_i32_2 = arith.constant 0 : i32
    return %c0_i32, %c0_i32_0, %c0_i32_1 : i32, i32, i32
  }
  func.func @transform_4(%arg0: i32) -> (i32, i32) {
    %c0_i32 = arith.constant 0 : i32
    %c0_i32_0 = arith.constant 0 : i32
    %c0_i32_1 = arith.constant 0 : i32
    return %c0_i32, %c0_i32_0 : i32, i32
  }
  func.func @transform_5(%arg0: i32) -> (i32, i32, i32) {
    %c0_i32 = arith.constant 0 : i32
    %c0_i32_0 = arith.constant 0 : i32
    %c0_i32_1 = arith.constant 0 : i32
    return %arg0, %c0_i32, %c0_i32_0 : i32, i32, i32
  }
}

</mosaic_0001>

<llo_original>
// kernel: tpu_custom_call.1
$region0: #{tpu_custom_call.1}
  #allocation0 [shape = 'u32[]', space=smem, size = 0x4, offset = 0x4, fixed_abs, tag = 'smem constant byte address 0x4 - core index']
  #allocation1 [shape = 'u32[72,128]{1,0:T(1,128)}', space=vmem, size = 0x9000, scoped, tag = 'internal scratch']
  #allocation2 [shape = 'f32[18,72]{1,0:T(8,128)}', space=vmem, size = 0x3000, scoped, tag = 'scratch operand']
  #allocation3 [shape = 'f32[18,144]{1,0:T(8,128)}', space=vmem, size = 0x6000, scoped, tag = 'scratch operand']
  %s0 = inlined_call_operand.hbm [shape: f32[2,16,64], index: 0, kind: input, shape index: {}]
  %s1 = inlined_call_operand.hbm [shape: f32[3,72,128], index: 1, kind: input, shape index: {}]
  %s2 = inlined_call_operand.vmem [shape: f32[1,128], index: 2, kind: input, shape index: {}]
  %s3 = inlined_call_operand.hbm [shape: f32[3,144,128], index: 3, kind: input, shape index: {}]
  %s4 = inlined_call_operand.vmem [shape: f32[1,128], index: 4, kind: input, shape index: {}]
  %s5 = inlined_call_operand.hbm [shape: f32[2,16,128], index: 5, kind: output, shape index: {}]
  %s6 = sld [smem:[#allocation0]]
  $region65: #{tpu_custom_call.1} parent=0
    _
  %s8 = ssub.s32 1, %s6
  %s9 = scalar_select 0, %s8, %s6
  $region1: #{tpu_custom_call.1} parent=0
    #allocation4 [shape = 'u8[16384]{0}', space=vmem, size = 0x4000, scoped, tag = 'input window, operand 0']
    #allocation5 [shape = 's32[2]{0}', space=sflag, size = 0x8, scoped, tag = 'scoped memory for tpu_custom_call.1']
    #allocation6 [shape = 's32[2]{0}', space=sflag, size = 0x8, scoped, tag = 'scoped memory for tpu_custom_call.1']
    #allocation7 [shape = 'u8[110592]{0}', space=vmem, size = 0x1b000, scoped, tag = 'input window, operand 1, single buffered']
    #allocation8 [shape = 's32[1]{0}', space=sflag, size = 0x4, scoped, tag = 'scoped memory for tpu_custom_call.1']
    #allocation9 [shape = 'u8[221184]{0}', space=vmem, size = 0x36000, scoped, tag = 'input window, operand 3, single buffered']
    #allocation10 [shape = 'u8[16384]{0}', space=vmem, size = 0x4000, scoped, tag = 'output window, operand 0']
    %10 = vsyncpa [#allocation5], 0
    %s11 = scalar_lea.sflag [#allocation5], 1
    %12 = vsyncpa %s11, 0
    %13 = vsyncpa [#allocation8], 0
    %14 = vsyncpa [#allocation6], 0
    %s15 = scalar_lea.sflag [#allocation6], 1
    %16 = vsyncpa %s15, 0
    loop: start=0, step=1, limit=4
    $region2: #{tpu_custom_call.1} parent=1 // loop_pre_header
      _
    $region3: #{tpu_custom_call.1} parent=1 // loop_header
      %s18 = sphi 0, %s22
      %p19 = scmp.ge.s32.totalorder %s18, 4
      %s28 = sphi 0, %s30
      %s31 = sphi 0, %s28
      %s32 = sphi 0, %s31
      %s48 = sphi 0, %s32
      %s52 = sphi 0, %s52
      %s54 = sphi 0, %s52
      %s55 = sphi 0, %s54
      %s69 = sphi 0, %s55
      %s73 = sphi 0, %s73
      %s75 = sphi 0, %s73
      %s76 = sphi 0, %s75
      %s90 = sphi 0, %s76
      %s94 = sphi 0, %s94
      %s96 = sphi 0, %s94
      %s97 = sphi 0, %s96
      %s111 = sphi 0, %s97
      %s115 = sphi 0, %s115
      %s117 = sphi 0, %s115
      %s118 = sphi 0, %s117
      %s132 = sphi 0, %s118
      %s138 = sphi 0, %s140
      %s141 = sphi 0, %s138
      %s142 = sphi 0, %s141
      %s158 = sphi 0, %s142
    $region4: #{tpu_custom_call.1} parent=1 // loop_header_branch
      %21 = sbr.rel (%p19) target = $region8
    $region5: #{tpu_custom_call.1} parent=1 // loop_body
      %s23 = ssub.s32 %s18, 1
      %s24 = ssub.s32 %s18, 2
      %s25 = sadd.s32 %s18, 1
      %s26 = ssub.s32 %s18, %s25
      %p27 = scmp.eq.s32.totalorder %s26, 0
      %s29 = sadd.s32 %s28, 1
      %s30 = scalar_select %p27, %s28, %s29
      %p33 = pneg %p27
      %p34 = scmp.eq.s32.totalorder %s18, 1
      %p35 = por %p33, %p34
      %p36 = scmp.ne.s32.totalorder %s28, %s31
      %p37 = scmp.eq.s32.totalorder %s18, 0
      %p38 = por %p36, %p37
      %p39 = scmp.ne.s32.totalorder %s28, %s31
      %p40 = scmp.eq.s32.totalorder %s23, 1
      %p41 = por %p39, %p40
      %p42 = scmp.ne.s32.totalorder %s31, %s32
      %p43 = scmp.eq.s32.totalorder %s23, 0
      %p44 = por %p42, %p43
      %p45 = scmp.ne.s32.totalorder %s31, %s32
      %p46 = scmp.eq.s32.totalorder %s24, 1
      %p47 = por %p45, %p46
      %p49 = scmp.ne.s32.totalorder %s32, %s48
      %p50 = scmp.eq.s32.totalorder %s24, 0
      %p51 = por %p49, %p50
      %s53 = sadd.s32 %s52, 1
      %p56 = scmp.eq.s32.totalorder %s18, 1
      %p57 = scmp.ne.s32.totalorder %s52, %s54
      %p58 = scmp.eq.s32.totalorder %s18, 0
      %p59 = por %p57, %p58
      %p60 = scmp.ne.s32.totalorder %s52, %s54
      %p61 = scmp.eq.s32.totalorder %s23, 1
      %p62 = por %p60, %p61
      %p63 = scmp.ne.s32.totalorder %s54, %s55
      %p64 = scmp.eq.s32.totalorder %s23, 0
      %p65 = por %p63, %p64
      %p66 = scmp.ne.s32.totalorder %s54, %s55
      %p67 = scmp.eq.s32.totalorder %s24, 1
      %p68 = por %p66, %p67
      %p70 = scmp.ne.s32.totalorder %s55, %s69
      %p71 = scmp.eq.s32.totalorder %s24, 0
      %p72 = por %p70, %p71
      %s74 = sadd.s32 %s73, 1
      %p77 = scmp.eq.s32.totalorder %s18, 1
      %p78 = scmp.ne.s32.totalorder %s73, %s75
      %p79 = scmp.eq.s32.totalorder %s18, 0
      %p80 = por %p78, %p79
      %p81 = scmp.ne.s32.totalorder %s73, %s75
      %p82 = scmp.eq.s32.totalorder %s23, 1
      %p83 = por %p81, %p82
      %p84 = scmp.ne.s32.totalorder %s75, %s76
      %p85 = scmp.eq.s32.totalorder %s23, 0
      %p86 = por %p84, %p85
      %p87 = scmp.ne.s32.totalorder %s75, %s76
      %p88 = scmp.eq.s32.totalorder %s24, 1
      %p89 = por %p87, %p88
      %p91 = scmp.ne.s32.totalorder %s76, %s90
      %p92 = scmp.eq.s32.totalorder %s24, 0
      %p93 = por %p91, %p92
      %s95 = sadd.s32 %s94, 1
      %p98 = scmp.eq.s32.totalorder %s18, 1
      %p99 = scmp.ne.s32.totalorder %s94, %s96
      %p100 = scmp.eq.s32.totalorder %s18, 0
      %p101 = por %p99, %p100
      %p102 = scmp.ne.s32.totalorder %s94, %s96
      %p103 = scmp.eq.s32.totalorder %s23, 1
      %p104 = por %p102, %p103
      %p105 = scmp.ne.s32.totalorder %s96, %s97
      %p106 = scmp.eq.s32.totalorder %s23, 0
      %p107 = por %p105, %p106
      %p108 = scmp.ne.s32.totalorder %s96, %s97
      %p109 = scmp.eq.s32.totalorder %s24, 1
      %p110 = por %p108, %p109
      %p112 = scmp.ne.s32.totalorder %s97, %s111
      %p113 = scmp.eq.s32.totalorder %s24, 0
      %p114 = por %p112, %p113
      %s116 = sadd.s32 %s115, 1
      %p119 = scmp.eq.s32.totalorder %s18, 1
      %p120 = scmp.ne.s32.totalorder %s115, %s117
      %p121 = scmp.eq.s32.totalorder %s18, 0
      %p122 = por %p120, %p121
      %p123 = scmp.ne.s32.totalorder %s115, %s117
      %p124 = scmp.eq.s32.totalorder %s23, 1
      %p125 = por %p123, %p124
      %p126 = scmp.ne.s32.totalorder %s117, %s118
      %p127 = scmp.eq.s32.totalorder %s23, 0
      %p128 = por %p126, %p127
      %p129 = scmp.ne.s32.totalorder %s117, %s118
      %p130 = scmp.eq.s32.totalorder %s24, 1
      %p131 = por %p129, %p130
      %p133 = scmp.ne.s32.totalorder %s118, %s132
      %p134 = scmp.eq.s32.totalorder %s24, 0
      %p135 = por %p133, %p134
      %s136 = ssub.s32 %s18, %s25
      %p137 = scmp.eq.s32.totalorder %s136, 0
      %s139 = sadd.s32 %s138, 1
      %s140 = scalar_select %p137, %s138, %s139
      %p143 = pneg %p137
      %p144 = scmp.eq.s32.totalorder %s18, 1
      %p145 = por %p143, %p144
      %p146 = scmp.ne.s32.totalorder %s138, %s141
      %p147 = scmp.eq.s32.totalorder %s18, 0
      %p148 = por %p146, %p147
      %p149 = scmp.ne.s32.totalorder %s138, %s141
      %p150 = scmp.eq.s32.totalorder %s23, 1
      %p151 = por %p149, %p150
      %p152 = scmp.ne.s32.totalorder %s141, %s142
      %p153 = scmp.eq.s32.totalorder %s23, 0
      %p154 = por %p152, %p153
      %p155 = scmp.ne.s32.totalorder %s141, %s142
      %p156 = scmp.eq.s32.totalorder %s24, 1
      %p157 = por %p155, %p156
      %p159 = scmp.ne.s32.totalorder %s142, %s158
      %p160 = scmp.eq.s32.totalorder %s24, 0
      %p161 = por %p159, %p160
      %p162 = scmp.le.s32.totalorder 1, %s18
      %p163 = scmp.lt.s32.totalorder %s18, 3
      %p164 = pnand %p162, %p163
      %p165 = pneg %p164
      // Predicated region
      $region9: #{tpu_custom_call.1} parent=5 // pred_check
        _
      $region10: #{tpu_custom_call.1} parent=5 // pred_check_branch
        %167 = sbr.rel (%p164) target = $region12
      $region11: #{tpu_custom_call.1} parent=5 // pred_region
        %s168 = ssub.s32 %s18, 1
        // Predicated region
        $region13: #{tpu_custom_call.1} parent=11 // pred_check
          %p169 = pneg %p65
        $region14: #{tpu_custom_call.1} parent=11 // pred_check_branch
          %171 = sbr.rel (%p169) target = $region16
        $region15: #{tpu_custom_call.1} parent=11 // pred_region
          %173 = vsyncadd [#allocation8], 0
          %s174 = sshll.u32 %s1, 4
          %s175 = int_to_ptr.hbm [resolvable:$true] %s174
          %s176 = sshll.u32 [#allocation7], 4
          %s177 = int_to_ptr.vmem [resolvable:$true] %s176
          %182 = dma.hbm_to_vmem [thread:$0]  %s175, 3456, %s177, [#allocation8], 128, 128, 8
        $region16: #{tpu_custom_call.1} parent=11 // pred_fallthru
          _
        // Predicated region
        $region17: #{tpu_custom_call.1} parent=11 // pred_check
          %p183 = pneg %p86
        $region18: #{tpu_custom_call.1} parent=11 // pred_check_branch
          %185 = sbr.rel (%p183) target = $region20
        $region19: #{tpu_custom_call.1} parent=11 // pred_region
          _
        $region20: #{tpu_custom_call.1} parent=11 // pred_fallthru
          _
        // Predicated region
        $region21: #{tpu_custom_call.1} parent=11 // pred_check
          %p186 = pneg %p107
        $region22: #{tpu_custom_call.1} parent=11 // pred_check_branch
          %188 = sbr.rel (%p186) target = $region24
        $region23: #{tpu_custom_call.1} parent=11 // pred_region
          %190 = vsyncadd [#allocation8], 0
          %s191 = sshll.u32 %s3, 4
          %s192 = int_to_ptr.hbm [resolvable:$true] %s191
          %s193 = sshll.u32 [#allocation9], 4
          %s194 = int_to_ptr.vmem [resolvable:$true] %s193
          %199 = dma.hbm_to_vmem [thread:$0]  %s192, 6912, %s194, [#allocation8], 128, 128, 8
        $region24: #{tpu_custom_call.1} parent=11 // pred_fallthru
          _
        // Predicated region
        $region25: #{tpu_custom_call.1} parent=11 // pred_check
          %p200 = pneg %p128
        $region26: #{tpu_custom_call.1} parent=11 // pred_check_branch
          %202 = sbr.rel (%p200) target = $region28
        $region27: #{tpu_custom_call.1} parent=11 // pred_region
          _
        $region28: #{tpu_custom_call.1} parent=11 // pred_fallthru
          _
      $region12: #{tpu_custom_call.1} parent=5 // pred_fallthru
        _
      %p203 = scmp.lt.s32.totalorder %s18, 2
      // Predicated region
      $region29: #{tpu_custom_call.1} parent=5 // pred_check
        %p204 = pneg %p203
      $region30: #{tpu_custom_call.1} parent=5 // pred_check_branch
        %206 = sbr.rel (%p204) target = $region32
      $region31: #{tpu_custom_call.1} parent=5 // pred_region
        // Predicated region
        $region33: #{tpu_custom_call.1} parent=31 // pred_check
          %p207 = pneg %p38
        $region34: #{tpu_custom_call.1} parent=31 // pred_check_branch
          %209 = sbr.rel (%p207) target = $region36
        $region35: #{tpu_custom_call.1} parent=31 // pred_region
          %s210 = sand.u32 %s28, 1
          %s211 = scalar_lea.sflag [#allocation5], %s210
          %s212 = sand.u32 %s28, 1
          %s213 = smul.addr %s212, 16
          %s214 = scalar_lea.vmem [#allocation4], %s213
          %216 = vsyncadd %s211, 0
          %s217 = smul.addr %s18, 2
          %s218 = smul.addr %s217, 8
          %s219 = scalar_lea.hbm %s0, %s218
          %s220 = sshll.u32 %s219, 4
          %s221 = int_to_ptr.hbm [resolvable:$true] %s220
          %s222 = sshll.u32 %s214, 4
          %s223 = int_to_ptr.vmem [resolvable:$true] %s222
          %228 = dma.hbm_to_vmem [thread:$0]  %s221, 256, %s223, %s211, 128, 128, 8
        $region36: #{tpu_custom_call.1} parent=31 // pred_fallthru
          _
      $region32: #{tpu_custom_call.1} parent=5 // pred_fallthru
        _
      %p229 = scmp.le.s32.totalorder 1, %s18
      %p230 = scmp.lt.s32.totalorder %s18, 3
      %p231 = pnand %p229, %p230
      %p232 = pneg %p231
      // Predicated region
      $region37: #{tpu_custom_call.1} parent=5 // pred_check
        _
      $region38: #{tpu_custom_call.1} parent=5 // pred_check_branch
        %234 = sbr.rel (%p231) target = $region40
      $region39: #{tpu_custom_call.1} parent=5 // pred_region
        %s235 = ssub.s32 %s18, 1
        %s236 = sand.u32 %s31, 1
        %s237 = scalar_lea.sflag [#allocation5], %s236
        %s238 = sand.u32 %s31, 1
        %s239 = smul.addr %s238, 16
        %s240 = scalar_lea.vmem [#allocation4], %s239
        // Predicated region
        $region41: #{tpu_custom_call.1} parent=39 // pred_check
          %p241 = pneg %p44
        $region42: #{tpu_custom_call.1} parent=39 // pred_check_branch
          %243 = sbr.rel (%p241) target = $region44
        $region43: #{tpu_custom_call.1} parent=39 // pred_region
          %245 = dma.done %s237, 256
        $region44: #{tpu_custom_call.1} parent=39 // pred_fallthru
          _
        // Predicated region
        $region45: #{tpu_custom_call.1} parent=39 // pred_check
          %p246 = pneg %p65
        $region46: #{tpu_custom_call.1} parent=39 // pred_check_branch
          %248 = sbr.rel (%p246) target = $region48
        $region47: #{tpu_custom_call.1} parent=39 // pred_region
          %250 = dma.done [#allocation8], 3456
        $region48: #{tpu_custom_call.1} parent=39 // pred_fallthru
          _
        // Predicated region
        $region49: #{tpu_custom_call.1} parent=39 // pred_check
          %p251 = pneg %p107
        $region50: #{tpu_custom_call.1} parent=39 // pred_check_branch
          %253 = sbr.rel (%p251) target = $region52
        $region51: #{tpu_custom_call.1} parent=39 // pred_region
          %255 = dma.done [#allocation8], 6912
        $region52: #{tpu_custom_call.1} parent=39 // pred_fallthru
          _
        %s256 = sand.u32 %s31, 1
        %s257 = scalar_lea.sflag [#allocation5], %s256
        %s258 = sand.u32 %s31, 1
        %s259 = smul.addr %s258, 16
        %s260 = scalar_lea.vmem [#allocation4], %s259
        %p261 = pneg %p44
        %p262 = pneg %p41
        %p263 = pneg %p65
        %p264 = pneg %p62
        %p265 = pneg %p86
        %p266 = pneg %p83
        %p267 = pneg %p107
        %p268 = pneg %p104
        %p269 = pneg %p128
        %p270 = pneg %p125
        %p271 = pneg %p154
        %p272 = pneg %p151
        %s273 = sand.u32 %s141, 1
        %s274 = scalar_lea.sflag [#allocation6], %s273
        %s275 = sand.u32 %s141, 1
        %s276 = smul.addr %s275, 16
        %s277 = scalar_lea.vmem [#allocation10], %s276
        %vm278 = vcmask 588800
        %279 = vst.msk [vmem:[#allocation2] sm:$0xff] %vm278, 0.0
        %280 = vst.msk [vmem:[#allocation2 + $0x8] sm:$0xff] %vm278, 0.0
        %vm281 = vcmask 582656
        %282 = vst.msk [vmem:[#allocation2 + $0x10] sm:$0x3] %vm281, 0.0
        %v283 = vld [vmem:[%s240] sm:$0xff]
        %v284 = vld [vmem:[%s240 + $0x8] sm:$0xff]
        %287 = vrot.lane.b32.xlu0 %v283, 4
        %v288 = vpop.permute.xlu0 %287
        %289 = vrot.lane.b32.xlu0 %v284, 4
        %v290 = vpop.permute.xlu0 %289
        %vm293 = vcmask 556064
        %294 = vst.msk [vmem:[#allocation2 + $0x1] sm:$0xff] %vm293, %v288
        %295 = vst.msk [vmem:[#allocation2 + $0x9] sm:$0xff] %vm293, %v290
        %v296 = vld [vmem:[#allocation2] sm:$0xff]
        %v297 = vld [vmem:[#allocation2 + $0x8] sm:$0xff]
        %v298 = vld [vmem:[#allocation7] sm:$0xff]
        %v299 = vld [vmem:[#allocation7 + $0x8] sm:$0xff]
        %v300 = vld [vmem:[#allocation7 + $0x10] sm:$0xff]
        %v301 = vld [vmem:[#allocation7 + $0x18] sm:$0xff]
        %v302 = vld [vmem:[#allocation7 + $0x20] sm:$0xff]
        %v303 = vld [vmem:[#allocation7 + $0x28] sm:$0xff]
        %v304 = vld [vmem:[#allocation7 + $0x30] sm:$0xff]
        %v305 = vld [vmem:[#allocation7 + $0x38] sm:$0xff]
        %v306 = vld [vmem:[#allocation7 + $0x40] sm:$0xff]
        %v307 = vld [vmem:[#allocation2 + $0x1] sm:$0xff]
        %v308 = vld [vmem:[#allocation2 + $0x9] sm:$0xff]
        %s309 = scalar_lea.vmem [#allocation7], 72
        %v310 = vld [vmem:[%s309] sm:$0xff]
        %v311 = vld [vmem:[%s309 + $0x8] sm:$0xff]
        %v312 = vld [vmem:[%s309 + $0x10] sm:$0xff]
        %v313 = vld [vmem:[%s309 + $0x18] sm:$0xff]
        %v314 = vld [vmem:[%s309 + $0x20] sm:$0xff]
        %v315 = vld [vmem:[%s309 + $0x28] sm:$0xff]
        %v316 = vld [vmem:[%s309 + $0x30] sm:$0xff]
        %v317 = vld [vmem:[%s309 + $0x38] sm:$0xff]
        %v318 = vld [vmem:[%s309 + $0x40] sm:$0xff]
        %v320 = vsel %vm278, %v307, 0
        %v323 = vsel %vm278, %v308, 0
        %325 = vmatpush.msra.mxu0 0.0
        %326 = vmatpush.msra.mxu0 0.0
        %327 = vmatpush.msra.mxu0 0.0
        %328 = vmatpush.msra.mxu0 0.0
        %329 = vmatpush.msra.mxu0 0.0
        %330 = vmatpush.msra.mxu0 0.0
        %331 = vmatpush.msra.mxu0 0.0
        %332 = vmatpush.msra.mxu0 %v318
        %333 = vmatpush.msra.mxu0 %v317
        %334 = vmatpush.msra.mxu0 %v316
        %335 = vmatpush.msra.mxu0 %v315
        %336 = vmatpush.msra.mxu0 %v314
        %337 = vmatpush.msra.mxu0 %v313
        %338 = vmatpush.msra.mxu0 %v312
        %339 = vmatpush.msra.mxu0 %v311
        %340 = vmatpush.msra.mxu0 %v310
        %341 = vmatmul.f32.gmra.mxu0 %v320
        %v342 = vpop.f32.mrf.mxu0
        %v343 = vadd.f32 0.0, %v342
        %344 = vmatmul.f32.gmra.mxu0 %v323
        %v345 = vpop.f32.mrf.mxu0
        %v346 = vadd.f32 0.0, %v345
        %347 = vdwg.mxu0
        %v349 = vsel %vm278, %v296, 0
        %v352 = vsel %vm278, %v297, 0
        %354 = vmatpush.msra.mxu0 0.0
        %355 = vmatpush.msra.mxu0 0.0
        %356 = vmatpush.msra.mxu0 0.0
        %357 = vmatpush.msra.mxu0 0.0
        %358 = vmatpush.msra.mxu0 0.0
        %359 = vmatpush.msra.mxu0 0.0
        %360 = vmatpush.msra.mxu0 0.0
        %361 = vmatpush.msra.mxu0 %v306
        %362 = vmatpush.msra.mxu0 %v305
        %363 = vmatpush.msra.mxu0 %v304
        %364 = vmatpush.msra.mxu0 %v303
        %365 = vmatpush.msra.mxu0 %v302
        %366 = vmatpush.msra.mxu0 %v301
        %367 = vmatpush.msra.mxu0 %v300
        %368 = vmatpush.msra.mxu0 %v299
        %369 = vmatpush.msra.mxu0 %v298
        %370 = vmatmul.f32.gmra.mxu0 %v349
        %v371 = vpop.f32.mrf.mxu0
        %v372 = vadd.f32 %v343, %v371
        %373 = vmatmul.f32.gmra.mxu0 %v352
        %v374 = vpop.f32.mrf.mxu0
        %v375 = vadd.f32 %v346, %v374
        %376 = vdwg.mxu0
        %v377 = vld [vmem:[#allocation2 + $0x2] sm:$0xff]
        %v378 = vld [vmem:[#allocation2 + $0xa] sm:$0xff]
        %s379 = scalar_lea.vmem [#allocation7], 144
        %v380 = vld [vmem:[%s379] sm:$0xff]
        %v381 = vld [vmem:[%s379 + $0x8] sm:$0xff]
        %v382 = vld [vmem:[%s379 + $0x10] sm:$0xff]
        %v383 = vld [vmem:[%s379 + $0x18] sm:$0xff]
        %v384 = vld [vmem:[%s379 + $0x20] sm:$0xff]
        %v385 = vld [vmem:[%s379 + $0x28] sm:$0xff]
        %v386 = vld [vmem:[%s379 + $0x30] sm:$0xff]
        %v387 = vld [vmem:[%s379 + $0x38] sm:$0xff]
        %v388 = vld [vmem:[%s379 + $0x40] sm:$0xff]
        %v390 = vsel %vm278, %v377, 0
        %v393 = vsel %vm278, %v378, 0
        %395 = vmatpush.msra.mxu0 0.0
        %396 = vmatpush.msra.mxu0 0.0
        %397 = vmatpush.msra.mxu0 0.0
        %398 = vmatpush.msra.mxu0 0.0
        %399 = vmatpush.msra.mxu0 0.0
        %400 = vmatpush.msra.mxu0 0.0
        %401 = vmatpush.msra.mxu0 0.0
        %402 = vmatpush.msra.mxu0 %v388
        %403 = vmatpush.msra.mxu0 %v387
        %404 = vmatpush.msra.mxu0 %v386
        %405 = vmatpush.msra.mxu0 %v385
        %406 = vmatpush.msra.mxu0 %v384
        %407 = vmatpush.msra.mxu0 %v383
        %408 = vmatpush.msra.mxu0 %v382
        %409 = vmatpush.msra.mxu0 %v381
        %410 = vmatpush.msra.mxu0 %v380
        %411 = vmatmul.f32.gmra.mxu0 %v390
        %v412 = vpop.f32.mrf.mxu0
        %v413 = vadd.f32 0.0, %v412
        %414 = vmatmul.f32.gmra.mxu0 %v393
        %v415 = vpop.f32.mrf.mxu0
        %v416 = vadd.f32 0.0, %v415
        %417 = vdwg.mxu0
        %v418 = vadd.f32 %v372, %v413
        %v419 = vadd.f32 %v375, %v416
        %v420 = vld [vmem:[%s2] sm:$0x1]
        %v422 = vperm.slane %v420, 0
        %v424 = vadd.f32 %v418, %v422
        %v425 = vadd.f32 %v419, %v422
        %v426 = vmax.f32 %v424, 0.0
        %v427 = vmax.f32 %v425, 0.0
        %428 = vst [vmem:[#allocation3] sm:$0xff] 0.0
        %vm429 = vcmask 130048
        %430 = vst.msk [vmem:[#allocation3 + $0x8] sm:$0xff] %vm429, 0.0
        %431 = vst [vmem:[#allocation3 + $0x10] sm:$0xff] 0.0
        %432 = vst.msk [vmem:[#allocation3 + $0x18] sm:$0xff] %vm429, 0.0
        %433 = vst [vmem:[#allocation3 + $0x20] sm:$0x3] 0.0
        %vm434 = vcmask 123904
        %435 = vst.msk [vmem:[#allocation3 + $0x28] sm:$0x3] %vm434, 0.0
        %vm438 = vcmask 1040384
        %v439 = vrot.slane %v426, 7
        %v440 = vrot.slane %v427, 7
        %v441 = vsel %vm438, %v439, %v440
        %442 = vrot.lane.b32.xlu0 %v439, 8
        %v443 = vpop.permute.xlu0 %442
        %444 = vrot.lane.b32.xlu0 %v441, 8
        %v445 = vpop.permute.xlu0 %444
        %446 = vrot.lane.b32.xlu0 %v440, 8
        %v447 = vpop.permute.xlu0 %446
        %vm451 = vcmask 1047617
        %452 = vst.msk [vmem:[#allocation3] sm:$0xfe] %vm451, %v443
        %vm453 = vcmask 64513
        %454 = vst.msk [vmem:[#allocation3 + $0x8] sm:$0xfe] %vm453, %v443
        %vm455 = vcmask 1047616
        %456 = vst.msk [vmem:[#allocation3 + $0x10] sm:$0xff] %vm455, %v445
        %vm457 = vcmask 64512
        %458 = vst.msk [vmem:[#allocation3 + $0x18] sm:$0xff] %vm457, %v445
        %vm459 = vcmask 1040448
        %460 = vst.msk [vmem:[#allocation3 + $0x20] sm:$0x1] %vm459, %v447
        %vm461 = vcmask 57344
        %462 = vst.msk [vmem:[#allocation3 + $0x28] sm:$0x1] %vm461, %v447
        %v463 = vld [vmem:[#allocation3] sm:$0xff]
        %v464 = vld [vmem:[#allocation3 + $0x8] sm:$0xff]
        %v465 = vld [vmem:[#allocation3 + $0x10] sm:$0xff]
        %v466 = vld [vmem:[#allocation3 + $0x18] sm:$0xff]
        %v467 = vld [vmem:[#allocation9] sm:$0xff]
        %v468 = vld [vmem:[#allocation9 + $0x8] sm:$0xff]
        %v469 = vld [vmem:[#allocation9 + $0x10] sm:$0xff]
        %v470 = vld [vmem:[#allocation9 + $0x18] sm:$0xff]
        %v471 = vld [vmem:[#allocation9 + $0x20] sm:$0xff]
        %v472 = vld [vmem:[#allocation9 + $0x28] sm:$0xff]
        %v473 = vld [vmem:[#allocation9 + $0x30] sm:$0xff]
        %v474 = vld [vmem:[#allocation9 + $0x38] sm:$0xff]
        %v475 = vld [vmem:[#allocation9 + $0x40] sm:$0xff]
        %v476 = vld [vmem:[#allocation9 + $0x48] sm:$0xff]
        %v477 = vld [vmem:[#allocation9 + $0x50] sm:$0xff]
        %v478 = vld [vmem:[#allocation9 + $0x58] sm:$0xff]
        %v479 = vld [vmem:[#allocation9 + $0x60] sm:$0xff]
        %v480 = vld [vmem:[#allocation9 + $0x68] sm:$0xff]
        %v481 = vld [vmem:[#allocation9 + $0x70] sm:$0xff]
        %v482 = vld [vmem:[#allocation9 + $0x78] sm:$0xff]
        %v483 = vld [vmem:[#allocation9 + $0x80] sm:$0xff]
        %v484 = vld [vmem:[#allocation9 + $0x88] sm:$0xff]
        %v485 = vld [vmem:[#allocation3] sm:$0xfe]
        %v486 = vld [vmem:[#allocation3 + $0x8] sm:$0xfe]
        %v487 = vld [vmem:[#allocation3 + $0x20] sm:$0x1]
        %v488 = vld [vmem:[#allocation3 + $0x28] sm:$0x1]
        %s489 = scalar_lea.vmem [#allocation9], 144
        %v490 = vld [vmem:[%s489] sm:$0xff]
        %v491 = vld [vmem:[%s489 + $0x8] sm:$0xff]
        %v492 = vld [vmem:[%s489 + $0x10] sm:$0xff]
        %v493 = vld [vmem:[%s489 + $0x18] sm:$0xff]
        %v494 = vld [vmem:[%s489 + $0x20] sm:$0xff]
        %v495 = vld [vmem:[%s489 + $0x28] sm:$0xff]
        %v496 = vld [vmem:[%s489 + $0x30] sm:$0xff]
        %v497 = vld [vmem:[%s489 + $0x38] sm:$0xff]
        %v498 = vld [vmem:[%s489 + $0x40] sm:$0xff]
        %v499 = vld [vmem:[%s489 + $0x48] sm:$0xff]
        %v500 = vld [vmem:[%s489 + $0x50] sm:$0xff]
        %v501 = vld [vmem:[%s489 + $0x58] sm:$0xff]
        %v502 = vld [vmem:[%s489 + $0x60] sm:$0xff]
        %v503 = vld [vmem:[%s489 + $0x68] sm:$0xff]
        %v504 = vld [vmem:[%s489 + $0x70] sm:$0xff]
        %v505 = vld [vmem:[%s489 + $0x78] sm:$0xff]
        %v506 = vld [vmem:[%s489 + $0x80] sm:$0xff]
        %v507 = vld [vmem:[%s489 + $0x88] sm:$0xff]
        %vm514 = vcmask 1046528
        %v515 = vrot.slane %v485, 1
        %v516 = vrot.slane %v465, 1
        %v517 = vsel %vm514, %v515, %v516
        %v518 = vrot.slane %v486, 1
        %v519 = vrot.slane %v466, 1
        %v520 = vsel %vm514, %v518, %v519
        %v521 = vrot.slane %v487, 1
        %v522 = vsel %vm514, %v516, %v521
        %v523 = vrot.slane %v488, 1
        %v524 = vsel %vm514, %v519, %v523
        %v527 = vsel %vm429, %v520, 0
        %v529 = vsel %vm429, %v524, 0
        %531 = vmatpush.msra.mxu0 %v505
        %532 = vmatpush.msra.mxu0 %v504
        %533 = vmatpush.msra.mxu0 %v503
        %534 = vmatpush.msra.mxu0 %v502
        %535 = vmatpush.msra.mxu0 %v501
        %536 = vmatpush.msra.mxu0 %v500
        %537 = vmatpush.msra.mxu0 %v499
        %538 = vmatpush.msra.mxu0 %v498
        %539 = vmatpush.msra.mxu0 %v497
        %540 = vmatpush.msra.mxu0 %v496
        %541 = vmatpush.msra.mxu0 %v495
        %542 = vmatpush.msra.mxu0 %v494
        %543 = vmatpush.msra.mxu0 %v493
        %544 = vmatpush.msra.mxu0 %v492
        %545 = vmatpush.msra.mxu0 %v491
        %546 = vmatpush.msra.mxu0 %v490
        %547 = vmatmul.f32.gmra.mxu0 %v517
        %v548 = vpop.f32.mrf.mxu0
        %v549 = vadd.f32 0.0, %v548
        %550 = vmatmul.f32.gmra.mxu0 %v522
        %v551 = vpop.f32.mrf.mxu0
        %v552 = vadd.f32 0.0, %v551
        %553 = vdwg.mxu0
        %554 = vmatpush.msra.mxu0 0.0
        %555 = vmatpush.msra.mxu0 0.0
        %556 = vmatpush.msra.mxu0 0.0
        %557 = vmatpush.msra.mxu0 0.0
        %558 = vmatpush.msra.mxu0 0.0
        %559 = vmatpush.msra.mxu0 0.0
        %560 = vmatpush.msra.mxu0 0.0
        %561 = vmatpush.msra.mxu0 0.0
        %562 = vmatpush.msra.mxu0 0.0
        %563 = vmatpush.msra.mxu0 0.0
        %564 = vmatpush.msra.mxu0 0.0
        %565 = vmatpush.msra.mxu0 0.0
        %566 = vmatpush.msra.mxu0 0.0
        %567 = vmatpush.msra.mxu0 0.0
        %568 = vmatpush.msra.mxu0 %v507
        %569 = vmatpush.msra.mxu0 %v506
        %570 = vmatmul.f32.gmra.mxu0 %v527
        %v571 = vpop.f32.mrf.mxu0
        %v572 = vadd.f32 %v549, %v571
        %573 = vmatmul.f32.gmra.mxu0 %v529
        %v574 = vpop.f32.mrf.mxu0
        %v575 = vadd.f32 %v552, %v574
        %576 = vdwg.mxu0
        %v578 = vsel %vm429, %v464, 0
        %v580 = vsel %vm429, %v466, 0
        %582 = vmatpush.msra.mxu0 %v482
        %583 = vmatpush.msra.mxu0 %v481
        %584 = vmatpush.msra.mxu0 %v480
        %585 = vmatpush.msra.mxu0 %v479
        %586 = vmatpush.msra.mxu0 %v478
        %587 = vmatpush.msra.mxu0 %v477
        %588 = vmatpush.msra.mxu0 %v476
        %589 = vmatpush.msra.mxu0 %v475
        %590 = vmatpush.msra.mxu0 %v474
        %591 = vmatpush.msra.mxu0 %v473
        %592 = vmatpush.msra.mxu0 %v472
        %593 = vmatpush.msra.mxu0 %v471
        %594 = vmatpush.msra.mxu0 %v470
        %595 = vmatpush.msra.mxu0 %v469
        %596 = vmatpush.msra.mxu0 %v468
        %597 = vmatpush.msra.mxu0 %v467
        %598 = vmatmul.f32.gmra.mxu0 %v463
        %v599 = vpop.f32.mrf.mxu0
        %v600 = vadd.f32 %v572, %v599
        %601 = vmatmul.f32.gmra.mxu0 %v465
        %v602 = vpop.f32.mrf.mxu0
        %v603 = vadd.f32 %v575, %v602
        %604 = vdwg.mxu0
        %605 = vmatpush.msra.mxu0 0.0
        %606 = vmatpush.msra.mxu0 0.0
        %607 = vmatpush.msra.mxu0 0.0
        %608 = vmatpush.msra.mxu0 0.0
        %609 = vmatpush.msra.mxu0 0.0
        %610 = vmatpush.msra.mxu0 0.0
        %611 = vmatpush.msra.mxu0 0.0
        %612 = vmatpush.msra.mxu0 0.0
        %613 = vmatpush.msra.mxu0 0.0
        %614 = vmatpush.msra.mxu0 0.0
        %615 = vmatpush.msra.mxu0 0.0
        %616 = vmatpush.msra.mxu0 0.0
        %617 = vmatpush.msra.mxu0 0.0
        %618 = vmatpush.msra.mxu0 0.0
        %619 = vmatpush.msra.mxu0 %v484
        %620 = vmatpush.msra.mxu0 %v483
        %621 = vmatmul.f32.gmra.mxu0 %v578
        %v622 = vpop.f32.mrf.mxu0
        %v623 = vadd.f32 %v600, %v622
        %624 = vmatmul.f32.gmra.mxu0 %v580
        %v625 = vpop.f32.mrf.mxu0
        %v626 = vadd.f32 %v603, %v625
        %627 = vdwg.mxu0
        %v628 = vld [vmem:[#allocation3] sm:$0xfc]
        %v629 = vld [vmem:[#allocation3 + $0x8] sm:$0xfc]
        %v630 = vld [vmem:[#allocation3 + $0x20] sm:$0x3]
        %v631 = vld [vmem:[#allocation3 + $0x28] sm:$0x3]
        %s632 = scalar_lea.vmem [#allocation9], 288
        %v633 = vld [vmem:[%s632] sm:$0xff]
        %v634 = vld [vmem:[%s632 + $0x8] sm:$0xff]
        %v635 = vld [vmem:[%s632 + $0x10] sm:$0xff]
        %v636 = vld [vmem:[%s632 + $0x18] sm:$0xff]
        %v637 = vld [vmem:[%s632 + $0x20] sm:$0xff]
        %v638 = vld [vmem:[%s632 + $0x28] sm:$0xff]
        %v639 = vld [vmem:[%s632 + $0x30] sm:$0xff]
        %v640 = vld [vmem:[%s632 + $0x38] sm:$0xff]
        %v641 = vld [vmem:[%s632 + $0x40] sm:$0xff]
        %v642 = vld [vmem:[%s632 + $0x48] sm:$0xff]
        %v643 = vld [vmem:[%s632 + $0x50] sm:$0xff]
        %v644 = vld [vmem:[%s632 + $0x58] sm:$0xff]
        %v645 = vld [vmem:[%s632 + $0x60] sm:$0xff]
        %v646 = vld [vmem:[%s632 + $0x68] sm:$0xff]
        %v647 = vld [vmem:[%s632 + $0x70] sm:$0xff]
        %v648 = vld [vmem:[%s632 + $0x78] sm:$0xff]
        %v649 = vld [vmem:[%s632 + $0x80] sm:$0xff]
        %v650 = vld [vmem:[%s632 + $0x88] sm:$0xff]
        %vm655 = vcmask 1045504
        %v656 = vrot.slane %v628, 2
        %v657 = vrot.slane %v465, 2
        %v658 = vsel %vm655, %v656, %v657
        %v659 = vrot.slane %v629, 2
        %v660 = vrot.slane %v466, 2
        %v661 = vsel %vm655, %v659, %v660
        %v662 = vrot.slane %v630, 2
        %v663 = vsel %vm655, %v657, %v662
        %v664 = vrot.slane %v631, 2
        %v665 = vsel %vm655, %v660, %v664
        %v668 = vsel %vm429, %v661, 0
        %v670 = vsel %vm429, %v665, 0
        %672 = vmatpush.msra.mxu0 %v648
        %673 = vmatpush.msra.mxu0 %v647
        %674 = vmatpush.msra.mxu0 %v646
        %675 = vmatpush.msra.mxu0 %v645
        %676 = vmatpush.msra.mxu0 %v644
        %677 = vmatpush.msra.mxu0 %v643
        %678 = vmatpush.msra.mxu0 %v642
        %679 = vmatpush.msra.mxu0 %v641
        %680 = vmatpush.msra.mxu0 %v640
        %681 = vmatpush.msra.mxu0 %v639
        %682 = vmatpush.msra.mxu0 %v638
        %683 = vmatpush.msra.mxu0 %v637
        %684 = vmatpush.msra.mxu0 %v636
        %685 = vmatpush.msra.mxu0 %v635
        %686 = vmatpush.msra.mxu0 %v634
        %687 = vmatpush.msra.mxu0 %v633
        %688 = vmatmul.f32.gmra.mxu0 %v658
        %v689 = vpop.f32.mrf.mxu0
        %v690 = vadd.f32 0.0, %v689
        %691 = vmatmul.f32.gmra.mxu0 %v663
        %v692 = vpop.f32.mrf.mxu0
        %v693 = vadd.f32 0.0, %v692
        %694 = vdwg.mxu0
        %695 = vmatpush.msra.mxu0 0.0
        %696 = vmatpush.msra.mxu0 0.0
        %697 = vmatpush.msra.mxu0 0.0
        %698 = vmatpush.msra.mxu0 0.0
        %699 = vmatpush.msra.mxu0 0.0
        %700 = vmatpush.msra.mxu0 0.0
        %701 = vmatpush.msra.mxu0 0.0
        %702 = vmatpush.msra.mxu0 0.0
        %703 = vmatpush.msra.mxu0 0.0
        %704 = vmatpush.msra.mxu0 0.0
        %705 = vmatpush.msra.mxu0 0.0
        %706 = vmatpush.msra.mxu0 0.0
        %707 = vmatpush.msra.mxu0 0.0
        %708 = vmatpush.msra.mxu0 0.0
        %709 = vmatpush.msra.mxu0 %v650
        %710 = vmatpush.msra.mxu0 %v649
        %711 = vmatmul.f32.gmra.mxu0 %v668
        %v712 = vpop.f32.mrf.mxu0
        %v713 = vadd.f32 %v690, %v712
        %714 = vmatmul.f32.gmra.mxu0 %v670
        %v715 = vpop.f32.mrf.mxu0
        %v716 = vadd.f32 %v693, %v715
        %717 = vdwg.mxu0
        %v718 = vadd.f32 %v623, %v713
        %v719 = vadd.f32 %v626, %v716
        %v720 = vld [vmem:[%s4] sm:$0x1]
        %v722 = vperm.slane %v720, 0
        %v724 = vadd.f32 %v718, %v722
        %v725 = vadd.f32 %v719, %v722
        %v726 = vmax.f32 %v724, 0.0
        %v727 = vmax.f32 %v725, 0.0
        %728 = vst [vmem:[%s277] sm:$0xff] %v726
        %729 = vst [vmem:[%s277 + $0x8] sm:$0xff] %v727
        %s730 = sand.u32 %s141, 1
        %s731 = scalar_lea.sflag [#allocation6], %s730
        %s732 = sand.u32 %s141, 1
        %s733 = smul.addr %s732, 16
        %s734 = scalar_lea.vmem [#allocation10], %s733
        // Predicated region
        $region53: #{tpu_custom_call.1} parent=39 // pred_check
          %p735 = pneg %p151
        $region54: #{tpu_custom_call.1} parent=39 // pred_check_branch
          %737 = sbr.rel (%p735) target = $region56
        $region55: #{tpu_custom_call.1} parent=39 // pred_region
          %739 = vsyncadd %s731, 0
          %s740 = smul.addr %s23, 2
          %s741 = smul.addr %s740, 8
          %s742 = scalar_lea.hbm %s5, %s741
          %s743 = sshll.u32 %s734, 4
          %s744 = int_to_ptr.vmem [resolvable:$true] %s743
          %s745 = sshll.u32 %s742, 4
          %s746 = int_to_ptr.hbm [resolvable:$true] %s745
          %751 = dma.vmem_to_hbm [thread:$0]  %s744, 256, %s746, %s731, 128, 128, 8
        $region56: #{tpu_custom_call.1} parent=39 // pred_fallthru
          _
      $region40: #{tpu_custom_call.1} parent=5 // pred_fallthru
        _
      %p752 = scmp.le.s32.totalorder 2, %s18
      // Predicated region
      $region57: #{tpu_custom_call.1} parent=5 // pred_check
        %p753 = pneg %p752
      $region58: #{tpu_custom_call.1} parent=5 // pred_check_branch
        %755 = sbr.rel (%p753) target = $region60
      $region59: #{tpu_custom_call.1} parent=5 // pred_region
        %s756 = ssub.s32 %s18, 2
        // Predicated region
        $region61: #{tpu_custom_call.1} parent=59 // pred_check
          %p757 = pneg %p157
        $region62: #{tpu_custom_call.1} parent=59 // pred_check_branch
          %759 = sbr.rel (%p757) target = $region64
        $region63: #{tpu_custom_call.1} parent=59 // pred_region
          %s760 = sand.u32 %s142, 1
          %s761 = scalar_lea.sflag [#allocation6], %s760
          %s762 = sand.u32 %s142, 1
          %s763 = smul.addr %s762, 16
          %s764 = scalar_lea.vmem [#allocation10], %s763
          %766 = dma.done %s761, 256
        $region64: #{tpu_custom_call.1} parent=59 // pred_fallthru
          _
      $region60: #{tpu_custom_call.1} parent=5 // pred_fallthru
        _
    $region6: #{tpu_custom_call.1} parent=1 // loop_footer
      %s22 = sadd.s32 1, %s18
    $region7: #{tpu_custom_call.1} parent=1 // loop_footer_branch
      %17 = sbr.rel target = $region3
    $region8: #{tpu_custom_call.1} parent=1 // loop_exit
      _
    %767 = vsyncpa [#allocation5], 1
    %s768 = scalar_lea.sflag [#allocation5], 1
    %769 = vsyncpa %s768, 1
    %770 = vsyncpa [#allocation8], 1
    %771 = vsyncpa [#allocation6], 1
    %s772 = scalar_lea.sflag [#allocation6], 1
    %773 = vsyncpa %s772, 1

</llo_original>
